<compile_context>
chip_gen: v7x
topology: tpu7x:2x2x1
jax: 0.10.0
libtpu: 0.0.40
codegen_flags: <defaults>
</compile_context>

<pallas_src>
from functools import partial

import jax
import jax.numpy as jnp
from jax.experimental import pallas as pl
from jax.experimental.pallas import tpu as pltpu


def _block_kernel(p_ref, w_ref, b_ref, o_ref):
    """Fused conv(im2col matmul) + bias + ReLU + 2x2 maxpool for one row tile.

    p_ref: (4, tm, kdim)   im2col patches, pool-phase-major leading axis (VMEM)
    w_ref: (kdim, c_pad)   conv weights, (KH,KW,Cin)-major rows, Cout padded
    b_ref: (1, c_pad)      conv bias, Cout padded
    o_ref: (tm, c_pad)     pooled output rows (flattened (n, h_p, w_p))
    """
    n_phase, tm, kdim = p_ref.shape

    # Collapse the phase axis into M (tm % 8 == 0, minor dim untouched -> no
    # relayout) and do ONE MXU matmul with f32 accumulation.
    p = p_ref[...].reshape(n_phase * tm, kdim)
    acc = jnp.dot(p, w_ref[...], preferred_element_type=jnp.float32)

    # Bias + ReLU: full-width VPU ops on dense (4*tm, 128) vregs.
    acc = jnp.maximum(acc + b_ref[...], 0.0)

    # 2x2 max pool (stride 2): rows are phase-major, so pooling is an
    # elementwise max of four contiguous, sublane-aligned (tm, c_pad) slabs.
    pooled = acc[0:tm]
    for ph in range(1, n_phase):
        pooled = jnp.maximum(pooled, acc[ph * tm:(ph + 1) * tm])

    # Dropout: inference mode -> identity.
    o_ref[...] = pooled.astype(o_ref.dtype)


def prepare_conv_params(weight, bias):
    """One-time relayout of PyTorch-style Conv2d params (static across calls).

    weight: (Cout, Cin, KH, KW) -> (KH*KW*Cin, c_pad);  bias: (Cout,) -> (1, c_pad)
    """
    cout, cin, kh, kw = weight.shape
    kdim = kh * kw * cin
    c_pad = ((cout + 127) // 128) * 128
    w_mat = jnp.transpose(weight, (2, 3, 1, 0)).reshape(kdim, cout)
    w_mat = jnp.pad(w_mat, ((0, 0), (0, c_pad - cout)))
    b_mat = jnp.pad(bias, (0, c_pad - cout)).reshape(1, c_pad)
    return w_mat, b_mat


def _default_num_row_tiles(total_rows):
    """1 row tile on single-TC chips (v5e/v6e); 2 on dual-TC v7x if divisible."""
    try:
        kind = jax.devices()[0].device_kind.lower()
    except Exception:
        kind = ""
    tiles = 2 if "v7" in kind else 1
    if total_rows % tiles != 0 or (total_rows // tiles) % 8 != 0:
        tiles = 1
    return tiles


@partial(jax.jit,
         static_argnames=("kh", "kw", "cout", "stride", "padding", "num_row_tiles"))
def block_forward(x_nchw, w_mat, b_mat, *, kh, kw, cout, stride, padding,
                  num_row_tiles=1):
    """x_nchw: (N, Cin, H, W) f32; w_mat/b_mat from prepare_conv_params."""
    n, cin, h, w = x_nchw.shape
    kdim, c_pad = w_mat.shape
    assert kdim == kh * kw * cin

    h_out = (h + 2 * padding - kh) // stride + 1
    w_out = (w + 2 * padding - kw) // stride + 1
    assert h_out % 2 == 0 and w_out % 2 == 0, "maxpool(2,2) needs even conv output"
    h_p, w_p = h_out // 2, w_out // 2
    total_rows = n * h_p * w_p

    if total_rows % num_row_tiles != 0 or (total_rows // num_row_tiles) % 8 != 0:
        num_row_tiles = 1
    tm = total_rows // num_row_tiles

    # ---------------- wrapper glue (fused under this jit) ----------------
    # NCHW -> NHWC, zero-pad spatially.
    x_nhwc = jnp.transpose(x_nchw, (0, 2, 3, 1))
    x_sp = jnp.pad(x_nhwc, ((0, 0), (padding, padding), (padding, padding), (0, 0)))

    # im2col: one strided slice per kernel tap, concatenated (kh, kw, cin)-minor.
    taps = []
    for kh_i in range(kh):
        for kw_i in range(kw):
            taps.append(jax.lax.slice(
                x_sp,
                (0, kh_i, kw_i, 0),
                (n,
                 kh_i + (h_out - 1) * stride + 1,
                 kw_i + (w_out - 1) * stride + 1,
                 cin),
                (1, stride, stride, 1),
            ))  # (N, h_out, w_out, cin)
    patches = jnp.concatenate(taps, axis=-1)              # (N, h_out, w_out, kdim)

    # Pool-phase-major: phase (h_sub*2 + w_sub) becomes the leading axis of
    # size 4; batch folds into the row (M) dimension.  No K padding.
    patches = patches.reshape(n, h_p, 2, w_p, 2, kdim)
    patches = jnp.transpose(patches, (2, 4, 0, 1, 3, 5))  # (2, 2, N, h_p, w_p, kdim)
    patches = patches.reshape(4, total_rows, kdim)
    # ----------------------------------------------------------------------

    out = pl.pallas_call(
        _block_kernel,
        out_shape=jax.ShapeDtypeStruct((total_rows, c_pad), x_nchw.dtype),
        grid_spec=pltpu.PrefetchScalarGridSpec(
            num_scalar_prefetch=0,
            grid=(num_row_tiles,),
            in_specs=[
                pl.BlockSpec((4, tm, kdim), lambda i: (0, i, 0)),
                pl.BlockSpec((kdim, c_pad), lambda i: (0, 0)),
                pl.BlockSpec((1, c_pad), lambda i: (0, 0)),
            ],
            out_specs=pl.BlockSpec((tm, c_pad), lambda i: (i, 0)),
        ),
        compiler_params=pltpu.CompilerParams(
            dimension_semantics=("parallel",),
        ),
    )(patches, w_mat, b_mat)

    # Drop the channel padding and return NCHW to match PyTorch (fused epilogue).
    out = out[:, :cout].reshape(n, h_p, w_p, cout)
    return jnp.transpose(out, (0, 3, 1, 2))


def _reference(x_nchw, weight, bias, *, stride, padding):
    """Plain-JAX reference (conv -> relu -> maxpool), NCHW."""
    y = jax.lax.conv_general_dilated(
        x_nchw, weight,
        window_strides=(stride, stride),
        padding=[(padding, padding), (padding, padding)],
        dimension_numbers=("NCHW", "OIHW", "NCHW"),
    ) + bias.reshape(1, -1, 1, 1)
    y = jnp.maximum(y, 0.0)
    y = jax.lax.reduce_window(
        y, -jnp.inf, jax.lax.max,
        window_dimensions=(1, 1, 2, 2),
        window_strides=(1, 1, 2, 2),
        padding="VALID",
    )
    return y


if __name__ == "__main__":
    # Small shapes consistent with the module: N=2, Cin=4, H=W=16,
    # Cout=8, kernel=3, stride=1, padding=1.
    N, CIN, H, W = 2, 4, 16, 16
    COUT, K, STRIDE, PAD = 8, 3, 1, 1

    key = jax.random.PRNGKey(0)
    kx, kw_, kb = jax.random.split(key, 3)
    x = jax.random.normal(kx, (N, CIN, H, W), dtype=jnp.float32)
    # Deterministic Conv2d-like init (uniform in +/- 1/sqrt(fan_in)).
    fan_in = CIN * K * K
    bound = 1.0 / (fan_in ** 0.5)
    weight = jax.random.uniform(kw_, (COUT, CIN, K, K), jnp.float32, -bound, bound)
    bias = jax.random.uniform(kb, (COUT,), jnp.float32, -bound, bound)

    # One-time (per-model) weight/bias relayout.
    w_mat, b_mat = prepare_conv_params(weight, bias)

    h_out = (H + 2 * PAD - K) // STRIDE + 1
    w_out = (W + 2 * PAD - K) // STRIDE + 1
    total_rows = N * (h_out // 2) * (w_out // 2)
    tiles = _default_num_row_tiles(total_rows)

    out = block_forward(x, w_mat, b_mat, kh=K, kw=K, cout=COUT,
                        stride=STRIDE, padding=PAD, num_row_tiles=tiles)
    out = jax.block_until_ready(out)

    ref = _reference(x, weight, bias, stride=STRIDE, padding=PAD)
    assert out.shape == (N, COUT, H // 2, W // 2), out.shape
    assert jnp.allclose(out, ref, atol=1e-4, rtol=1e-4), "mismatch vs reference"

    print("KERNEL_OK")
</pallas_src>

<mosaic_0001>
module attributes {stable_mosaic.version = 11 : i64} {
  func.func @_block_kernel(%arg0: i32, %arg1: memref<4x128x36xf32, #tpu.memory_space<vmem>>, %arg2: memref<36x128xf32, #tpu.memory_space<vmem>>, %arg3: memref<1x128xf32, #tpu.memory_space<vmem>>, %arg4: memref<128x128xf32, #tpu.memory_space<vmem>>) attributes {dimension_semantics = [#tpu.dimension_semantics<parallel>], iteration_bounds = array<i64: 1>, scalar_prefetch = 0 : i64, scratch_operands = 0 : i64, tpu.core_type = #tpu.core_type<tc>, window_params = [{transform_indices = @transform_0, window_bounds = array<i64: 4, 128, 36>}, {pipeline_mode = #tpu.pipeline_mode<synchronous>, transform_indices = @transform_1, window_bounds = array<i64: 36, 128>}, {pipeline_mode = #tpu.pipeline_mode<synchronous>, transform_indices = @transform_2, window_bounds = array<i64: 1, 128>}, {transform_indices = @transform_3, window_bounds = array<i64: 128, 128>}]} {
    %c0 = arith.constant 0 : index
    %c0_0 = arith.constant 0 : index
    %c0_1 = arith.constant 0 : index
    %0 = vector.load %arg1[%c0, %c0_0, %c0_1] : memref<4x128x36xf32, #tpu.memory_space<vmem>>, vector<4x128x36xf32>
    %1 = vector.shape_cast %0 : vector<4x128x36xf32> to vector<512x36xf32>
    %c0_2 = arith.constant 0 : index
    %c0_3 = arith.constant 0 : index
    %2 = vector.load %arg2[%c0_2, %c0_3] : memref<36x128xf32, #tpu.memory_space<vmem>>, vector<36x128xf32>
    %cst = arith.constant dense<0.000000e+00> : vector<512x128xf32>
    %3 = tpu.matmul %1, %2, %cst {dimension_numbers = #tpu.dot_dimension_numbers<[1], [0], [0], [1], [0, 0, 1, 1], [], []>} : vector<512x36xf32>, vector<36x128xf32>, vector<512x128xf32> -> vector<512x128xf32>
    %c0_4 = arith.constant 0 : index
    %c0_5 = arith.constant 0 : index
    %4 = vector.load %arg3[%c0_4, %c0_5] : memref<1x128xf32, #tpu.memory_space<vmem>>, vector<1x128xf32>
    %5 = vector.broadcast %4 : vector<1x128xf32> to vector<512x128xf32>
    %6 = arith.addf %3, %5 : vector<512x128xf32>
    %cst_6 = arith.constant 0.000000e+00 : f32
    %7 = vector.broadcast %cst_6 : f32 to vector<512x128xf32>
    %8 = arith.maximumf %6, %7 : vector<512x128xf32>
    %9 = vector.extract_strided_slice %8 {offsets = [0, 0], sizes = [128, 128], strides = [1, 1]} : vector<512x128xf32> to vector<128x128xf32>
    %10 = vector.extract_strided_slice %8 {offsets = [128, 0], sizes = [128, 128], strides = [1, 1]} : vector<512x128xf32> to vector<128x128xf32>
    %11 = arith.maximumf %9, %10 : vector<128x128xf32>
    %12 = vector.extract_strided_slice %8 {offsets = [256, 0], sizes = [128, 128], strides = [1, 1]} : vector<512x128xf32> to vector<128x128xf32>
    %13 = arith.maximumf %11, %12 : vector<128x128xf32>
    %14 = vector.extract_strided_slice %8 {offsets = [384, 0], sizes = [128, 128], strides = [1, 1]} : vector<512x128xf32> to vector<128x128xf32>
    %15 = arith.maximumf %13, %14 : vector<128x128xf32>
    %c0_7 = arith.constant 0 : index
    %c0_8 = arith.constant 0 : index
    %16 = vector.load %arg4[%c0_7, %c0_8] : memref<128x128xf32, #tpu.memory_space<vmem>>, vector<128x128xf32>
    tpu.vector_store %arg4[%c0_7, %c0_8], %15 {strides = array<i32>} : memref<128x128xf32, #tpu.memory_space<vmem>>, vector<128x128xf32>,
    return
  }
  func.func @transform_0(%arg0: i32) -> (i32, i32, i32) {
    %c0_i32 = arith.constant 0 : i32
    %c0_i32_0 = arith.constant 0 : i32
    %c0_i32_1 = arith.constant 0 : i32
    return %c0_i32, %arg0, %c0_i32_0 : i32, i32, i32
  }
  func.func @transform_1(%arg0: i32) -> (i32, i32) {
    %c0_i32 = arith.constant 0 : i32
    %c0_i32_0 = arith.constant 0 : i32
    %c0_i32_1 = arith.constant 0 : i32
    return %c0_i32, %c0_i32_0 : i32, i32
  }
  func.func @transform_2(%arg0: i32) -> (i32, i32) {
    %c0_i32 = arith.constant 0 : i32
    %c0_i32_0 = arith.constant 0 : i32
    %c0_i32_1 = arith.constant 0 : i32
    return %c0_i32, %c0_i32_0 : i32, i32
  }
  func.func @transform_3(%arg0: i32) -> (i32, i32) {
    %c0_i32 = arith.constant 0 : i32
    %c0_i32_0 = arith.constant 0 : i32
    return %arg0, %c0_i32 : i32, i32
  }
}

</mosaic_0001>

<llo_original>
// kernel: block_forward.1
$region0: #{block_forward.1}
  #allocation0 [shape = 'u32[]', space=smem, size = 0x4, offset = 0x4, fixed_abs, tag = 'smem constant byte address 0x4 - core index']
  #allocation1 [shape = 'u32[144,128]{1,0:T(1,128)}', space=vmem, size = 0x12000, scoped, tag = 'internal scratch']
  %s0 = inlined_call_operand.vmem [shape: f32[4,128,36], index: 0, kind: input, shape index: {}]
  %s1 = inlined_call_operand.vmem [shape: f32[36,128], index: 1, kind: input, shape index: {}]
  %s2 = inlined_call_operand.vmem [shape: f32[1,128], index: 2, kind: input, shape index: {}]
  %s3 = inlined_call_operand.vmem [shape: f32[128,128], index: 3, kind: output, shape index: {}]
  %s4 = sld [smem:[#allocation0]]
  $region22: #{block_forward.1} parent=0
    _
  %s6 = ssub.s32 1, %s4
  %s7 = scalar_select 0, %s6, %s4
  // Predicated region
  $region2: #{block_forward.1} parent=0 // pred_check
    _
  $region3: #{block_forward.1} parent=0 // pred_check_branch
    %9 = sbr.rel (0) target = $region5
  $region4: #{block_forward.1} parent=0 // pred_region
    _
  $region5: #{block_forward.1} parent=0 // pred_fallthru
    _
  // Predicated region
  $region6: #{block_forward.1} parent=0 // pred_check
    _
  $region7: #{block_forward.1} parent=0 // pred_check_branch
    %11 = sbr.rel (0) target = $region9
  $region8: #{block_forward.1} parent=0 // pred_region
    _
  $region9: #{block_forward.1} parent=0 // pred_fallthru
    _
  // Predicated region
  $region10: #{block_forward.1} parent=0 // pred_check
    _
  $region11: #{block_forward.1} parent=0 // pred_check_branch
    %13 = sbr.rel (0) target = $region13
  $region12: #{block_forward.1} parent=0 // pred_region
    _
  $region13: #{block_forward.1} parent=0 // pred_fallthru
    _
  %v14 = vld [vmem:[%s0] sm:$0xff]
  %v15 = vld [vmem:[%s0 + $0x8] sm:$0xff]
  %v16 = vld [vmem:[%s0 + $0x10] sm:$0xff]
  %v17 = vld [vmem:[%s0 + $0x18] sm:$0xff]
  %v18 = vld [vmem:[%s0 + $0x20] sm:$0xff]
  %v19 = vld [vmem:[%s0 + $0x28] sm:$0xff]
  %v20 = vld [vmem:[%s0 + $0x30] sm:$0xff]
  %v21 = vld [vmem:[%s0 + $0x38] sm:$0xff]
  %v22 = vld [vmem:[%s0 + $0x40] sm:$0xff]
  %v23 = vld [vmem:[%s0 + $0x48] sm:$0xff]
  %v24 = vld [vmem:[%s0 + $0x50] sm:$0xff]
  %v25 = vld [vmem:[%s0 + $0x58] sm:$0xff]
  %v26 = vld [vmem:[%s0 + $0x60] sm:$0xff]
  %v27 = vld [vmem:[%s0 + $0x68] sm:$0xff]
  %v28 = vld [vmem:[%s0 + $0x70] sm:$0xff]
  %v29 = vld [vmem:[%s0 + $0x78] sm:$0xff]
  %v30 = vld [vmem:[%s0 + $0x80] sm:$0xff]
  %v31 = vld [vmem:[%s0 + $0x88] sm:$0xff]
  %v32 = vld [vmem:[%s0 + $0x90] sm:$0xff]
  %v33 = vld [vmem:[%s0 + $0x98] sm:$0xff]
  %v34 = vld [vmem:[%s0 + $0xa0] sm:$0xff]
  %v35 = vld [vmem:[%s0 + $0xa8] sm:$0xff]
  %v36 = vld [vmem:[%s0 + $0xb0] sm:$0xff]
  %v37 = vld [vmem:[%s0 + $0xb8] sm:$0xff]
  %v38 = vld [vmem:[%s0 + $0xc0] sm:$0xff]
  %v39 = vld [vmem:[%s0 + $0xc8] sm:$0xff]
  %v40 = vld [vmem:[%s0 + $0xd0] sm:$0xff]
  %v41 = vld [vmem:[%s0 + $0xd8] sm:$0xff]
  %v42 = vld [vmem:[%s0 + $0xe0] sm:$0xff]
  %v43 = vld [vmem:[%s0 + $0xe8] sm:$0xff]
  %v44 = vld [vmem:[%s0 + $0xf0] sm:$0xff]
  %v45 = vld [vmem:[%s0 + $0xf8] sm:$0xff]
  %v46 = vld [vmem:[%s0 + $0x100] sm:$0xff]
  %v47 = vld [vmem:[%s0 + $0x108] sm:$0xff]
  %v48 = vld [vmem:[%s0 + $0x110] sm:$0xff]
  %v49 = vld [vmem:[%s0 + $0x118] sm:$0xff]
  %v50 = vld [vmem:[%s0 + $0x120] sm:$0xff]
  %v51 = vld [vmem:[%s0 + $0x128] sm:$0xff]
  %v52 = vld [vmem:[%s0 + $0x130] sm:$0xff]
  %v53 = vld [vmem:[%s0 + $0x138] sm:$0xff]
  %v54 = vld [vmem:[%s0 + $0x140] sm:$0xff]
  %v55 = vld [vmem:[%s0 + $0x148] sm:$0xff]
  %v56 = vld [vmem:[%s0 + $0x150] sm:$0xff]
  %v57 = vld [vmem:[%s0 + $0x158] sm:$0xff]
  %v58 = vld [vmem:[%s0 + $0x160] sm:$0xff]
  %v59 = vld [vmem:[%s0 + $0x168] sm:$0xff]
  %v60 = vld [vmem:[%s0 + $0x170] sm:$0xff]
  %v61 = vld [vmem:[%s0 + $0x178] sm:$0xff]
  %v62 = vld [vmem:[%s0 + $0x180] sm:$0xff]
  %v63 = vld [vmem:[%s0 + $0x188] sm:$0xff]
  %v64 = vld [vmem:[%s0 + $0x190] sm:$0xff]
  %v65 = vld [vmem:[%s0 + $0x198] sm:$0xff]
  %v66 = vld [vmem:[%s0 + $0x1a0] sm:$0xff]
  %v67 = vld [vmem:[%s0 + $0x1a8] sm:$0xff]
  %v68 = vld [vmem:[%s0 + $0x1b0] sm:$0xff]
  %v69 = vld [vmem:[%s0 + $0x1b8] sm:$0xff]
  %v70 = vld [vmem:[%s0 + $0x1c0] sm:$0xff]
  %v71 = vld [vmem:[%s0 + $0x1c8] sm:$0xff]
  %v72 = vld [vmem:[%s0 + $0x1d0] sm:$0xff]
  %v73 = vld [vmem:[%s0 + $0x1d8] sm:$0xff]
  %v74 = vld [vmem:[%s0 + $0x1e0] sm:$0xff]
  %v75 = vld [vmem:[%s0 + $0x1e8] sm:$0xff]
  %v76 = vld [vmem:[%s0 + $0x1f0] sm:$0xff]
  %v77 = vld [vmem:[%s0 + $0x1f8] sm:$0xff]
  %v78 = vld [vmem:[%s1] sm:$0xff]
  %v79 = vld [vmem:[%s1 + $0x8] sm:$0xff]
  %v80 = vld [vmem:[%s1 + $0x10] sm:$0xff]
  %v81 = vld [vmem:[%s1 + $0x18] sm:$0xff]
  %v82 = vld [vmem:[%s1 + $0x20] sm:$0xf]
  %v83 = vld [vmem:[%s2] sm:$0x1]
  %v85 = vlaneseq
  %v86 = vshrl.u32 %v85, 7
  %v87 = vsub.s32 0, %v86
  %v88 = vrot.slane %v83, %v87
  %vm90 = vcmask 293888
  %v92 = vsel %vm90, %v14, 0
  %v95 = vsel %vm90, %v15, 0
  %v98 = vsel %vm90, %v16, 0
  %v101 = vsel %vm90, %v17, 0
  %v104 = vsel %vm90, %v18, 0
  %v107 = vsel %vm90, %v19, 0
  %v110 = vsel %vm90, %v20, 0
  %v113 = vsel %vm90, %v21, 0
  %v116 = vsel %vm90, %v22, 0
  %v119 = vsel %vm90, %v23, 0
  %v122 = vsel %vm90, %v24, 0
  %v125 = vsel %vm90, %v25, 0
  %v128 = vsel %vm90, %v26, 0
  %v131 = vsel %vm90, %v27, 0
  %v134 = vsel %vm90, %v28, 0
  %v137 = vsel %vm90, %v29, 0
  %v140 = vsel %vm90, %v30, 0
  %v143 = vsel %vm90, %v31, 0
  %v146 = vsel %vm90, %v32, 0
  %v149 = vsel %vm90, %v33, 0
  %v152 = vsel %vm90, %v34, 0
  %v155 = vsel %vm90, %v35, 0
  %v158 = vsel %vm90, %v36, 0
  %v161 = vsel %vm90, %v37, 0
  %v164 = vsel %vm90, %v38, 0
  %v167 = vsel %vm90, %v39, 0
  %v170 = vsel %vm90, %v40, 0
  %v173 = vsel %vm90, %v41, 0
  %v176 = vsel %vm90, %v42, 0
  %v179 = vsel %vm90, %v43, 0
  %v182 = vsel %vm90, %v44, 0
  %v185 = vsel %vm90, %v45, 0
  %v188 = vsel %vm90, %v46, 0
  %v191 = vsel %vm90, %v47, 0
  %v194 = vsel %vm90, %v48, 0
  %v197 = vsel %vm90, %v49, 0
  %v200 = vsel %vm90, %v50, 0
  %v203 = vsel %vm90, %v51, 0
  %v206 = vsel %vm90, %v52, 0
  %v209 = vsel %vm90, %v53, 0
  %v212 = vsel %vm90, %v54, 0
  %v215 = vsel %vm90, %v55, 0
  %v218 = vsel %vm90, %v56, 0
  %v221 = vsel %vm90, %v57, 0
  %v224 = vsel %vm90, %v58, 0
  %v227 = vsel %vm90, %v59, 0
  %v230 = vsel %vm90, %v60, 0
  %v233 = vsel %vm90, %v61, 0
  %v236 = vsel %vm90, %v62, 0
  %v239 = vsel %vm90, %v63, 0
  %v242 = vsel %vm90, %v64, 0
  %v245 = vsel %vm90, %v65, 0
  %v248 = vsel %vm90, %v66, 0
  %v251 = vsel %vm90, %v67, 0
  %v254 = vsel %vm90, %v68, 0
  %v257 = vsel %vm90, %v69, 0
  %v260 = vsel %vm90, %v70, 0
  %v263 = vsel %vm90, %v71, 0
  %v266 = vsel %vm90, %v72, 0
  %v269 = vsel %vm90, %v73, 0
  %v272 = vsel %vm90, %v74, 0
  %v275 = vsel %vm90, %v75, 0
  %v278 = vsel %vm90, %v76, 0
  %v281 = vsel %vm90, %v77, 0
  %vm283 = vcmask 1043456
  %v285 = vsel %vm283, %v82, 0
  %287 = vmatprep.subr.mxu0 0.0
  %288 = vmatpush1.msra.mxu0 %v78
  %289 = vmatprep.subr.mxu0 0.0
  %290 = vmatpush1.msra.mxu0 %v79
  %291 = vmatprep.subr.mxu0 0.0
  %292 = vmatpush1.msra.mxu0 %v80
  %293 = vmatprep.subr.mxu0 0.0
  %294 = vmatpush1.msra.mxu0 %v81
  %295 = vmatprep.subr.mxu0 0.0
  %296 = vmatpush1.msra.mxu0 %v285
  %297 = vmatprep.subr.mxu0 0.0
  %298 = vmatpush1.msra.mxu0 0.0
  %299 = vmatprep.subr.mxu0 0.0
  %300 = vmatpush1.msra.mxu0 0.0
  %301 = vmatprep.subr.mxu0 0.0
  %302 = vmatpush1.msra.mxu0 0.0
  %303 = vmatprep.subr.mxu0 0.0
  %304 = vmatpush1.msra.mxu0 0.0
  %305 = vmatprep.subr.mxu0 0.0
  %306 = vmatpush1.msra.mxu0 0.0
  %307 = vmatprep.subr.mxu0 0.0
  %308 = vmatpush1.msra.mxu0 0.0
  %309 = vmatprep.subr.mxu0 0.0
  %310 = vmatpush1.msra.mxu0 0.0
  %311 = vmatprep.subr.mxu0 0.0
  %312 = vmatpush1.msra.mxu0 0.0
  %313 = vmatprep.subr.mxu0 0.0
  %314 = vmatpush1.msra.mxu0 0.0
  %315 = vmatprep.subr.mxu0 0.0
  %316 = vmatpush1.msra.mxu0 0.0
  %317 = vmatprep.subr.mxu0 0.0
  %318 = vmatpush1.msra.mxu0 0.0
  %319 = vmatprep.subr.mxu0 0.0
  %320 = vmatpush1.msra.mxu0 0.0
  %321 = vmatprep.subr.mxu0 0.0
  %322 = vmatpush1.msra.mxu0 0.0
  %323 = vmatprep.subr.mxu0 0.0
  %324 = vmatpush1.msra.mxu0 0.0
  %325 = vmatprep.subr.mxu0 0.0
  %326 = vmatpush1.msra.mxu0 0.0
  %327 = vmatprep.subr.mxu0 0.0
  %328 = vmatpush1.msra.mxu0 0.0
  %329 = vmatprep.subr.mxu0 0.0
  %330 = vmatpush1.msra.mxu0 0.0
  %331 = vmatprep.subr.mxu0 0.0
  %332 = vmatpush1.msra.mxu0 0.0
  %333 = vmatprep.subr.mxu0 0.0
  %334 = vmatpush1.msra.mxu0 0.0
  %335 = vmatprep.subr.mxu0 0.0
  %336 = vmatpush1.msra.mxu0 0.0
  %337 = vmatprep.subr.mxu0 0.0
  %338 = vmatpush1.msra.mxu0 0.0
  %339 = vmatprep.subr.mxu0 0.0
  %340 = vmatpush1.msra.mxu0 0.0
  %341 = vmatprep.subr.mxu0 0.0
  %342 = vmatpush1.msra.mxu0 0.0
  %343 = vmatprep.subr.mxu0 0.0
  %344 = vmatpush1.msra.mxu0 0.0
  %345 = vmatprep.subr.mxu0 0.0
  %346 = vmatpush1.msra.mxu0 0.0
  %347 = vmatprep.subr.mxu0 0.0
  %348 = vmatpush1.msra.mxu0 0.0
  %349 = vmatprep.subr.mxu0 0.0
  %350 = vmatpush1.msra.mxu0 0.0
  %351 = vmatprep.mubr.f32.mxu0 0.0
  %352 = vmatmul.mubr.f32.gmra.mrb[0].mxu0 %v92
  %v353 = vpop.f32.mrb[0].mxu0
  %v354 = vadd.f32 %v88, %v353
  %v355 = vpop.f32.mrb[0].mxu0
  %356 = vmatprep.mubr.f32.mxu0 0.0
  %357 = vmatmul.mubr.f32.gmra.mrb[0].mxu0 %v95
  %v358 = vpop.f32.mrb[0].mxu0
  %v359 = vadd.f32 %v88, %v358
  %v360 = vpop.f32.mrb[0].mxu0
  %361 = vmatprep.mubr.f32.mxu0 0.0
  %362 = vmatmul.mubr.f32.gmra.mrb[0].mxu0 %v98
  %v363 = vpop.f32.mrb[0].mxu0
  %v364 = vadd.f32 %v88, %v363
  %v365 = vpop.f32.mrb[0].mxu0
  %366 = vmatprep.mubr.f32.mxu0 0.0
  %367 = vmatmul.mubr.f32.gmra.mrb[0].mxu0 %v101
  %v368 = vpop.f32.mrb[0].mxu0
  %v369 = vadd.f32 %v88, %v368
  %v370 = vpop.f32.mrb[0].mxu0
  %371 = vmatprep.mubr.f32.mxu0 0.0
  %372 = vmatmul.mubr.f32.gmra.mrb[0].mxu0 %v104
  %v373 = vpop.f32.mrb[0].mxu0
  %v374 = vadd.f32 %v88, %v373
  %v375 = vpop.f32.mrb[0].mxu0
  %376 = vmatprep.mubr.f32.mxu0 0.0
  %377 = vmatmul.mubr.f32.gmra.mrb[0].mxu0 %v107
  %v378 = vpop.f32.mrb[0].mxu0
  %v379 = vadd.f32 %v88, %v378
  %v380 = vpop.f32.mrb[0].mxu0
  %381 = vmatprep.mubr.f32.mxu0 0.0
  %382 = vmatmul.mubr.f32.gmra.mrb[0].mxu0 %v110
  %v383 = vpop.f32.mrb[0].mxu0
  %v384 = vadd.f32 %v88, %v383
  %v385 = vpop.f32.mrb[0].mxu0
  %386 = vmatprep.mubr.f32.mxu0 0.0
  %387 = vmatmul.mubr.f32.gmra.mrb[0].mxu0 %v113
  %v388 = vpop.f32.mrb[0].mxu0
  %v389 = vadd.f32 %v88, %v388
  %v390 = vpop.f32.mrb[0].mxu0
  %391 = vmatprep.mubr.f32.mxu0 0.0
  %392 = vmatmul.mubr.f32.gmra.mrb[0].mxu0 %v116
  %v393 = vpop.f32.mrb[0].mxu0
  %v394 = vadd.f32 %v88, %v393
  %v395 = vpop.f32.mrb[0].mxu0
  %396 = vmatprep.mubr.f32.mxu0 0.0
  %397 = vmatmul.mubr.f32.gmra.mrb[0].mxu0 %v119
  %v398 = vpop.f32.mrb[0].mxu0
  %v399 = vadd.f32 %v88, %v398
  %v400 = vpop.f32.mrb[0].mxu0
  %401 = vmatprep.mubr.f32.mxu0 0.0
  %402 = vmatmul.mubr.f32.gmra.mrb[0].mxu0 %v122
  %v403 = vpop.f32.mrb[0].mxu0
  %v404 = vadd.f32 %v88, %v403
  %v405 = vpop.f32.mrb[0].mxu0
  %406 = vmatprep.mubr.f32.mxu0 0.0
  %407 = vmatmul.mubr.f32.gmra.mrb[0].mxu0 %v125
  %v408 = vpop.f32.mrb[0].mxu0
  %v409 = vadd.f32 %v88, %v408
  %v410 = vpop.f32.mrb[0].mxu0
  %411 = vmatprep.mubr.f32.mxu0 0.0
  %412 = vmatmul.mubr.f32.gmra.mrb[0].mxu0 %v128
  %v413 = vpop.f32.mrb[0].mxu0
  %v414 = vadd.f32 %v88, %v413
  %v415 = vpop.f32.mrb[0].mxu0
  %416 = vmatprep.mubr.f32.mxu0 0.0
  %417 = vmatmul.mubr.f32.gmra.mrb[0].mxu0 %v131
  %v418 = vpop.f32.mrb[0].mxu0
  %v419 = vadd.f32 %v88, %v418
  %v420 = vpop.f32.mrb[0].mxu0
  %421 = vmatprep.mubr.f32.mxu0 0.0
  %422 = vmatmul.mubr.f32.gmra.mrb[0].mxu0 %v134
  %v423 = vpop.f32.mrb[0].mxu0
  %v424 = vadd.f32 %v88, %v423
  %v425 = vpop.f32.mrb[0].mxu0
  %426 = vmatprep.mubr.f32.mxu0 0.0
  %427 = vmatmul.mubr.f32.gmra.mrb[0].mxu0 %v137
  %v428 = vpop.f32.mrb[0].mxu0
  %v429 = vadd.f32 %v88, %v428
  %v430 = vpop.f32.mrb[0].mxu0
  %431 = vmatprep.mubr.f32.mxu0 0.0
  %432 = vmatmul.mubr.f32.gmra.mrb[0].mxu0 %v140
  %v433 = vpop.f32.mrb[0].mxu0
  %v434 = vadd.f32 %v88, %v433
  %v435 = vpop.f32.mrb[0].mxu0
  %436 = vmatprep.mubr.f32.mxu0 0.0
  %437 = vmatmul.mubr.f32.gmra.mrb[0].mxu0 %v143
  %v438 = vpop.f32.mrb[0].mxu0
  %v439 = vadd.f32 %v88, %v438
  %v440 = vpop.f32.mrb[0].mxu0
  %441 = vmatprep.mubr.f32.mxu0 0.0
  %442 = vmatmul.mubr.f32.gmra.mrb[0].mxu0 %v146
  %v443 = vpop.f32.mrb[0].mxu0
  %v444 = vadd.f32 %v88, %v443
  %v445 = vpop.f32.mrb[0].mxu0
  %446 = vmatprep.mubr.f32.mxu0 0.0
  %447 = vmatmul.mubr.f32.gmra.mrb[0].mxu0 %v149
  %v448 = vpop.f32.mrb[0].mxu0
  %v449 = vadd.f32 %v88, %v448
  %v450 = vpop.f32.mrb[0].mxu0
  %451 = vmatprep.mubr.f32.mxu0 0.0
  %452 = vmatmul.mubr.f32.gmra.mrb[0].mxu0 %v152
  %v453 = vpop.f32.mrb[0].mxu0
  %v454 = vadd.f32 %v88, %v453
  %v455 = vpop.f32.mrb[0].mxu0
  %456 = vmatprep.mubr.f32.mxu0 0.0
  %457 = vmatmul.mubr.f32.gmra.mrb[0].mxu0 %v155
  %v458 = vpop.f32.mrb[0].mxu0
  %v459 = vadd.f32 %v88, %v458
  %v460 = vpop.f32.mrb[0].mxu0
  %461 = vmatprep.mubr.f32.mxu0 0.0
  %462 = vmatmul.mubr.f32.gmra.mrb[0].mxu0 %v158
  %v463 = vpop.f32.mrb[0].mxu0
  %v464 = vadd.f32 %v88, %v463
  %v465 = vpop.f32.mrb[0].mxu0
  %466 = vmatprep.mubr.f32.mxu0 0.0
  %467 = vmatmul.mubr.f32.gmra.mrb[0].mxu0 %v161
  %v468 = vpop.f32.mrb[0].mxu0
  %v469 = vadd.f32 %v88, %v468
  %v470 = vpop.f32.mrb[0].mxu0
  %471 = vmatprep.mubr.f32.mxu0 0.0
  %472 = vmatmul.mubr.f32.gmra.mrb[0].mxu0 %v164
  %v473 = vpop.f32.mrb[0].mxu0
  %v474 = vadd.f32 %v88, %v473
  %v475 = vpop.f32.mrb[0].mxu0
  %476 = vmatprep.mubr.f32.mxu0 0.0
  %477 = vmatmul.mubr.f32.gmra.mrb[0].mxu0 %v167
  %v478 = vpop.f32.mrb[0].mxu0
  %v479 = vadd.f32 %v88, %v478
  %v480 = vpop.f32.mrb[0].mxu0
  %481 = vmatprep.mubr.f32.mxu0 0.0
  %482 = vmatmul.mubr.f32.gmra.mrb[0].mxu0 %v170
  %v483 = vpop.f32.mrb[0].mxu0
  %v484 = vadd.f32 %v88, %v483
  %v485 = vpop.f32.mrb[0].mxu0
  %486 = vmatprep.mubr.f32.mxu0 0.0
  %487 = vmatmul.mubr.f32.gmra.mrb[0].mxu0 %v173
  %v488 = vpop.f32.mrb[0].mxu0
  %v489 = vadd.f32 %v88, %v488
  %v490 = vpop.f32.mrb[0].mxu0
  %491 = vmatprep.mubr.f32.mxu0 0.0
  %492 = vmatmul.mubr.f32.gmra.mrb[0].mxu0 %v176
  %v493 = vpop.f32.mrb[0].mxu0
  %v494 = vadd.f32 %v88, %v493
  %v495 = vpop.f32.mrb[0].mxu0
  %496 = vmatprep.mubr.f32.mxu0 0.0
  %497 = vmatmul.mubr.f32.gmra.mrb[0].mxu0 %v179
  %v498 = vpop.f32.mrb[0].mxu0
  %v499 = vadd.f32 %v88, %v498
  %v500 = vpop.f32.mrb[0].mxu0
  %501 = vmatprep.mubr.f32.mxu0 0.0
  %502 = vmatmul.mubr.f32.gmra.mrb[0].mxu0 %v182
  %v503 = vpop.f32.mrb[0].mxu0
  %v504 = vadd.f32 %v88, %v503
  %v505 = vpop.f32.mrb[0].mxu0
  %506 = vmatprep.mubr.f32.mxu0 0.0
  %507 = vmatmul.mubr.f32.gmra.mrb[0].mxu0 %v185
  %v508 = vpop.f32.mrb[0].mxu0
  %v509 = vadd.f32 %v88, %v508
  %v510 = vpop.f32.mrb[0].mxu0
  %511 = vmatprep.mubr.f32.mxu0 0.0
  %512 = vmatmul.mubr.f32.gmra.mrb[0].mxu0 %v188
  %v513 = vpop.f32.mrb[0].mxu0
  %v514 = vadd.f32 %v88, %v513
  %v515 = vpop.f32.mrb[0].mxu0
  %516 = vmatprep.mubr.f32.mxu0 0.0
  %517 = vmatmul.mubr.f32.gmra.mrb[0].mxu0 %v191
  %v518 = vpop.f32.mrb[0].mxu0
  %v519 = vadd.f32 %v88, %v518
  %v520 = vpop.f32.mrb[0].mxu0
  %521 = vmatprep.mubr.f32.mxu0 0.0
  %522 = vmatmul.mubr.f32.gmra.mrb[0].mxu0 %v194
  %v523 = vpop.f32.mrb[0].mxu0
  %v524 = vadd.f32 %v88, %v523
  %v525 = vpop.f32.mrb[0].mxu0
  %526 = vmatprep.mubr.f32.mxu0 0.0
  %527 = vmatmul.mubr.f32.gmra.mrb[0].mxu0 %v197
  %v528 = vpop.f32.mrb[0].mxu0
  %v529 = vadd.f32 %v88, %v528
  %v530 = vpop.f32.mrb[0].mxu0
  %531 = vmatprep.mubr.f32.mxu0 0.0
  %532 = vmatmul.mubr.f32.gmra.mrb[0].mxu0 %v200
  %v533 = vpop.f32.mrb[0].mxu0
  %v534 = vadd.f32 %v88, %v533
  %v535 = vpop.f32.mrb[0].mxu0
  %536 = vmatprep.mubr.f32.mxu0 0.0
  %537 = vmatmul.mubr.f32.gmra.mrb[0].mxu0 %v203
  %v538 = vpop.f32.mrb[0].mxu0
  %v539 = vadd.f32 %v88, %v538
  %v540 = vpop.f32.mrb[0].mxu0
  %541 = vmatprep.mubr.f32.mxu0 0.0
  %542 = vmatmul.mubr.f32.gmra.mrb[0].mxu0 %v206
  %v543 = vpop.f32.mrb[0].mxu0
  %v544 = vadd.f32 %v88, %v543
  %v545 = vpop.f32.mrb[0].mxu0
  %546 = vmatprep.mubr.f32.mxu0 0.0
  %547 = vmatmul.mubr.f32.gmra.mrb[0].mxu0 %v209
  %v548 = vpop.f32.mrb[0].mxu0
  %v549 = vadd.f32 %v88, %v548
  %v550 = vpop.f32.mrb[0].mxu0
  %551 = vmatprep.mubr.f32.mxu0 0.0
  %552 = vmatmul.mubr.f32.gmra.mrb[0].mxu0 %v212
  %v553 = vpop.f32.mrb[0].mxu0
  %v554 = vadd.f32 %v88, %v553
  %v555 = vpop.f32.mrb[0].mxu0
  %556 = vmatprep.mubr.f32.mxu0 0.0
  %557 = vmatmul.mubr.f32.gmra.mrb[0].mxu0 %v215
  %v558 = vpop.f32.mrb[0].mxu0
  %v559 = vadd.f32 %v88, %v558
  %v560 = vpop.f32.mrb[0].mxu0
  %561 = vmatprep.mubr.f32.mxu0 0.0
  %562 = vmatmul.mubr.f32.gmra.mrb[0].mxu0 %v218
  %v563 = vpop.f32.mrb[0].mxu0
  %v564 = vadd.f32 %v88, %v563
  %v565 = vpop.f32.mrb[0].mxu0
  %566 = vmatprep.mubr.f32.mxu0 0.0
  %567 = vmatmul.mubr.f32.gmra.mrb[0].mxu0 %v221
  %v568 = vpop.f32.mrb[0].mxu0
  %v569 = vadd.f32 %v88, %v568
  %v570 = vpop.f32.mrb[0].mxu0
  %571 = vmatprep.mubr.f32.mxu0 0.0
  %572 = vmatmul.mubr.f32.gmra.mrb[0].mxu0 %v224
  %v573 = vpop.f32.mrb[0].mxu0
  %v574 = vadd.f32 %v88, %v573
  %v575 = vpop.f32.mrb[0].mxu0
  %576 = vmatprep.mubr.f32.mxu0 0.0
  %577 = vmatmul.mubr.f32.gmra.mrb[0].mxu0 %v227
  %v578 = vpop.f32.mrb[0].mxu0
  %v579 = vadd.f32 %v88, %v578
  %v580 = vpop.f32.mrb[0].mxu0
  %581 = vmatprep.mubr.f32.mxu0 0.0
  %582 = vmatmul.mubr.f32.gmra.mrb[0].mxu0 %v230
  %v583 = vpop.f32.mrb[0].mxu0
  %v584 = vadd.f32 %v88, %v583
  %v585 = vpop.f32.mrb[0].mxu0
  %586 = vmatprep.mubr.f32.mxu0 0.0
  %587 = vmatmul.mubr.f32.gmra.mrb[0].mxu0 %v233
  %v588 = vpop.f32.mrb[0].mxu0
  %v589 = vadd.f32 %v88, %v588
  %v590 = vpop.f32.mrb[0].mxu0
  %591 = vmatprep.mubr.f32.mxu0 0.0
  %592 = vmatmul.mubr.f32.gmra.mrb[0].mxu0 %v236
  %v593 = vpop.f32.mrb[0].mxu0
  %v594 = vadd.f32 %v88, %v593
  %v595 = vpop.f32.mrb[0].mxu0
  %596 = vmatprep.mubr.f32.mxu0 0.0
  %597 = vmatmul.mubr.f32.gmra.mrb[0].mxu0 %v239
  %v598 = vpop.f32.mrb[0].mxu0
  %v599 = vadd.f32 %v88, %v598
  %v600 = vpop.f32.mrb[0].mxu0
  %601 = vmatprep.mubr.f32.mxu0 0.0
  %602 = vmatmul.mubr.f32.gmra.mrb[0].mxu0 %v242
  %v603 = vpop.f32.mrb[0].mxu0
  %v604 = vadd.f32 %v88, %v603
  %v605 = vpop.f32.mrb[0].mxu0
  %606 = vmatprep.mubr.f32.mxu0 0.0
  %607 = vmatmul.mubr.f32.gmra.mrb[0].mxu0 %v245
  %v608 = vpop.f32.mrb[0].mxu0
  %v609 = vadd.f32 %v88, %v608
  %v610 = vpop.f32.mrb[0].mxu0
  %611 = vmatprep.mubr.f32.mxu0 0.0
  %612 = vmatmul.mubr.f32.gmra.mrb[0].mxu0 %v248
  %v613 = vpop.f32.mrb[0].mxu0
  %v614 = vadd.f32 %v88, %v613
  %v615 = vpop.f32.mrb[0].mxu0
  %616 = vmatprep.mubr.f32.mxu0 0.0
  %617 = vmatmul.mubr.f32.gmra.mrb[0].mxu0 %v251
  %v618 = vpop.f32.mrb[0].mxu0
  %v619 = vadd.f32 %v88, %v618
  %v620 = vpop.f32.mrb[0].mxu0
  %621 = vmatprep.mubr.f32.mxu0 0.0
  %622 = vmatmul.mubr.f32.gmra.mrb[0].mxu0 %v254
  %v623 = vpop.f32.mrb[0].mxu0
  %v624 = vadd.f32 %v88, %v623
  %v625 = vpop.f32.mrb[0].mxu0
  %626 = vmatprep.mubr.f32.mxu0 0.0
  %627 = vmatmul.mubr.f32.gmra.mrb[0].mxu0 %v257
  %v628 = vpop.f32.mrb[0].mxu0
  %v629 = vadd.f32 %v88, %v628
  %v630 = vpop.f32.mrb[0].mxu0
  %631 = vmatprep.mubr.f32.mxu0 0.0
  %632 = vmatmul.mubr.f32.gmra.mrb[0].mxu0 %v260
  %v633 = vpop.f32.mrb[0].mxu0
  %v634 = vadd.f32 %v88, %v633
  %v635 = vpop.f32.mrb[0].mxu0
  %636 = vmatprep.mubr.f32.mxu0 0.0
  %637 = vmatmul.mubr.f32.gmra.mrb[0].mxu0 %v263
  %v638 = vpop.f32.mrb[0].mxu0
  %v639 = vadd.f32 %v88, %v638
  %v640 = vpop.f32.mrb[0].mxu0
  %641 = vmatprep.mubr.f32.mxu0 0.0
  %642 = vmatmul.mubr.f32.gmra.mrb[0].mxu0 %v266
  %v643 = vpop.f32.mrb[0].mxu0
  %v644 = vadd.f32 %v88, %v643
  %v645 = vpop.f32.mrb[0].mxu0
  %646 = vmatprep.mubr.f32.mxu0 0.0
  %647 = vmatmul.mubr.f32.gmra.mrb[0].mxu0 %v269
  %v648 = vpop.f32.mrb[0].mxu0
  %v649 = vadd.f32 %v88, %v648
  %v650 = vpop.f32.mrb[0].mxu0
  %651 = vmatprep.mubr.f32.mxu0 0.0
  %652 = vmatmul.mubr.f32.gmra.mrb[0].mxu0 %v272
  %v653 = vpop.f32.mrb[0].mxu0
  %v654 = vadd.f32 %v88, %v653
  %v655 = vpop.f32.mrb[0].mxu0
  %656 = vmatprep.mubr.f32.mxu0 0.0
  %657 = vmatmul.mubr.f32.gmra.mrb[0].mxu0 %v275
  %v658 = vpop.f32.mrb[0].mxu0
  %v659 = vadd.f32 %v88, %v658
  %v660 = vpop.f32.mrb[0].mxu0
  %661 = vmatprep.mubr.f32.mxu0 0.0
  %662 = vmatmul.mubr.f32.gmra.mrb[0].mxu0 %v278
  %v663 = vpop.f32.mrb[0].mxu0
  %v664 = vadd.f32 %v88, %v663
  %v665 = vpop.f32.mrb[0].mxu0
  %666 = vmatprep.mubr.f32.mxu0 0.0
  %667 = vmatmul.mubr.f32.gmra.mrb[0].mxu0 %v281
  %v668 = vpop.f32.mrb[0].mxu0
  %v669 = vadd.f32 %v88, %v668
  %v670 = vpop.f32.mrb[0].mxu0
  %671 = vdwg.mxu0
  %v672 = vmax.f32 %v354, 0.0
  %v673 = vmax.f32 %v359, 0.0
  %v674 = vmax.f32 %v364, 0.0
  %v675 = vmax.f32 %v369, 0.0
  %v676 = vmax.f32 %v374, 0.0
  %v677 = vmax.f32 %v379, 0.0
  %v678 = vmax.f32 %v384, 0.0
  %v679 = vmax.f32 %v389, 0.0
  %v680 = vmax.f32 %v394, 0.0
  %v681 = vmax.f32 %v399, 0.0
  %v682 = vmax.f32 %v404, 0.0
  %v683 = vmax.f32 %v409, 0.0
  %v684 = vmax.f32 %v414, 0.0
  %v685 = vmax.f32 %v419, 0.0
  %v686 = vmax.f32 %v424, 0.0
  %v687 = vmax.f32 %v429, 0.0
  %v688 = vmax.f32 %v434, 0.0
  %v689 = vmax.f32 %v439, 0.0
  %v690 = vmax.f32 %v444, 0.0
  %v691 = vmax.f32 %v449, 0.0
  %v692 = vmax.f32 %v454, 0.0
  %v693 = vmax.f32 %v459, 0.0
  %v694 = vmax.f32 %v464, 0.0
  %v695 = vmax.f32 %v469, 0.0
  %v696 = vmax.f32 %v474, 0.0
  %v697 = vmax.f32 %v479, 0.0
  %v698 = vmax.f32 %v484, 0.0
  %v699 = vmax.f32 %v489, 0.0
  %v700 = vmax.f32 %v494, 0.0
  %v701 = vmax.f32 %v499, 0.0
  %v702 = vmax.f32 %v504, 0.0
  %v703 = vmax.f32 %v509, 0.0
  %v704 = vmax.f32 %v514, 0.0
  %v705 = vmax.f32 %v519, 0.0
  %v706 = vmax.f32 %v524, 0.0
  %v707 = vmax.f32 %v529, 0.0
  %v708 = vmax.f32 %v534, 0.0
  %v709 = vmax.f32 %v539, 0.0
  %v710 = vmax.f32 %v544, 0.0
  %v711 = vmax.f32 %v549, 0.0
  %v712 = vmax.f32 %v554, 0.0
  %v713 = vmax.f32 %v559, 0.0
  %v714 = vmax.f32 %v564, 0.0
  %v715 = vmax.f32 %v569, 0.0
  %v716 = vmax.f32 %v574, 0.0
  %v717 = vmax.f32 %v579, 0.0
  %v718 = vmax.f32 %v584, 0.0
  %v719 = vmax.f32 %v589, 0.0
  %v720 = vmax.f32 %v594, 0.0
  %v721 = vmax.f32 %v599, 0.0
  %v722 = vmax.f32 %v604, 0.0
  %v723 = vmax.f32 %v609, 0.0
  %v724 = vmax.f32 %v614, 0.0
  %v725 = vmax.f32 %v619, 0.0
  %v726 = vmax.f32 %v624, 0.0
  %v727 = vmax.f32 %v629, 0.0
  %v728 = vmax.f32 %v634, 0.0
  %v729 = vmax.f32 %v639, 0.0
  %v730 = vmax.f32 %v644, 0.0
  %v731 = vmax.f32 %v649, 0.0
  %v732 = vmax.f32 %v654, 0.0
  %v733 = vmax.f32 %v659, 0.0
  %v734 = vmax.f32 %v664, 0.0
  %v735 = vmax.f32 %v669, 0.0
  %v736 = vmax.f32 %v672, %v688
  %v737 = vmax.f32 %v673, %v689
  %v738 = vmax.f32 %v674, %v690
  %v739 = vmax.f32 %v675, %v691
  %v740 = vmax.f32 %v676, %v692
  %v741 = vmax.f32 %v677, %v693
  %v742 = vmax.f32 %v678, %v694
  %v743 = vmax.f32 %v679, %v695
  %v744 = vmax.f32 %v680, %v696
  %v745 = vmax.f32 %v681, %v697
  %v746 = vmax.f32 %v682, %v698
  %v747 = vmax.f32 %v683, %v699
  %v748 = vmax.f32 %v684, %v700
  %v749 = vmax.f32 %v685, %v701
  %v750 = vmax.f32 %v686, %v702
  %v751 = vmax.f32 %v687, %v703
  %v752 = vmax.f32 %v736, %v704
  %v753 = vmax.f32 %v737, %v705
  %v754 = vmax.f32 %v738, %v706
  %v755 = vmax.f32 %v739, %v707
  %v756 = vmax.f32 %v740, %v708
  %v757 = vmax.f32 %v741, %v709
  %v758 = vmax.f32 %v742, %v710
  %v759 = vmax.f32 %v743, %v711
  %v760 = vmax.f32 %v744, %v712
  %v761 = vmax.f32 %v745, %v713
  %v762 = vmax.f32 %v746, %v714
  %v763 = vmax.f32 %v747, %v715
  %v764 = vmax.f32 %v748, %v716
  %v765 = vmax.f32 %v749, %v717
  %v766 = vmax.f32 %v750, %v718
  %v767 = vmax.f32 %v751, %v719
  %v768 = vmax.f32 %v752, %v720
  %v769 = vmax.f32 %v753, %v721
  %v770 = vmax.f32 %v754, %v722
  %v771 = vmax.f32 %v755, %v723
  %v772 = vmax.f32 %v756, %v724
  %v773 = vmax.f32 %v757, %v725
  %v774 = vmax.f32 %v758, %v726
  %v775 = vmax.f32 %v759, %v727
  %v776 = vmax.f32 %v760, %v728
  %v777 = vmax.f32 %v761, %v729
  %v778 = vmax.f32 %v762, %v730
  %v779 = vmax.f32 %v763, %v731
  %v780 = vmax.f32 %v764, %v732
  %v781 = vmax.f32 %v765, %v733
  %v782 = vmax.f32 %v766, %v734
  %v783 = vmax.f32 %v767, %v735
  %784 = vst [vmem:[%s3] sm:$0xff] %v768
  %785 = vst [vmem:[%s3 + $0x8] sm:$0xff] %v769
  %786 = vst [vmem:[%s3 + $0x10] sm:$0xff] %v770
  %787 = vst [vmem:[%s3 + $0x18] sm:$0xff] %v771
  %788 = vst [vmem:[%s3 + $0x20] sm:$0xff] %v772
  %789 = vst [vmem:[%s3 + $0x28] sm:$0xff] %v773
  %790 = vst [vmem:[%s3 + $0x30] sm:$0xff] %v774
  %791 = vst [vmem:[%s3 + $0x38] sm:$0xff] %v775
  %792 = vst [vmem:[%s3 + $0x40] sm:$0xff] %v776
  %793 = vst [vmem:[%s3 + $0x48] sm:$0xff] %v777
  %794 = vst [vmem:[%s3 + $0x50] sm:$0xff] %v778
  %795 = vst [vmem:[%s3 + $0x58] sm:$0xff] %v779
  %796 = vst [vmem:[%s3 + $0x60] sm:$0xff] %v780
  %797 = vst [vmem:[%s3 + $0x68] sm:$0xff] %v781
  %798 = vst [vmem:[%s3 + $0x70] sm:$0xff] %v782
  %799 = vst [vmem:[%s3 + $0x78] sm:$0xff] %v783
  // Predicated region
  $region14: #{block_forward.1} parent=0 // pred_check
    _
  $region15: #{block_forward.1} parent=0 // pred_check_branch
    %801 = sbr.rel (0) target = $region17
  $region16: #{block_forward.1} parent=0 // pred_region
    _
  $region17: #{block_forward.1} parent=0 // pred_fallthru
    _
  // Predicated region
  $region18: #{block_forward.1} parent=0 // pred_check
    _
  $region19: #{block_forward.1} parent=0 // pred_check_branch
    %803 = sbr.rel (0) target = $region21
  $region20: #{block_forward.1} parent=0 // pred_region
    _
  $region21: #{block_forward.1} parent=0 // pred_fallthru
    _

</llo_original>
